<compile_context>
chip_gen: v6e
topology: v6e:2x2x1
jax: 0.10.0
libtpu: 0.0.40
codegen_flags: <defaults>
</compile_context>

<pallas_src>
import functools

import jax
import jax.numpy as jnp
from jax.experimental import pallas as pl
from jax.experimental.pallas import tpu as pltpu

latent_dim = 10
n_classes = 5
n_features = 100
n_hidden = 20

RECON_PAD = 128  # lane-dense padded width for the reconstruction output


def _round_up(n, m):
    return ((n + m - 1) // m) * m


def cvae_kernel(xc_ref, c_ref, eps_ref,
                w1_ref, b1_ref,
                w2mu_ref, w2lv_ref, b2mu_ref, b2lv_ref,
                w3z_ref, w3c_ref, b3_ref,
                w4p_ref, b4p_ref,
                recon_ref, mulv_ref):
    xc = xc_ref[...]
    c = c_ref[...]

    # ----- encoder layer 1: Linear(n_features+n_classes, n_hidden) + ReLU -----
    h = jnp.dot(xc, w1_ref[...], preferred_element_type=jnp.float32) + b1_ref[...]
    h = jnp.maximum(h, 0.0)

    # ----- encoder layer 2: Linear(n_hidden, 2*latent_dim), W2 pre-split -----
    mu = jnp.dot(h, w2mu_ref[...], preferred_element_type=jnp.float32) + b2mu_ref[...]
    log_var = jnp.dot(h, w2lv_ref[...], preferred_element_type=jnp.float32) + b2lv_ref[...]

    # ----- reparameterize: z = eps * exp(0.5*log_var) + mu -----
    z = eps_ref[...] * jnp.exp(0.5 * log_var) + mu

    # ----- decoder layer 1: Linear(latent_dim+n_classes, n_hidden) + ReLU -----
    h2 = (jnp.dot(z, w3z_ref[...], preferred_element_type=jnp.float32)
          + jnp.dot(c, w3c_ref[...], preferred_element_type=jnp.float32)
          + b3_ref[...])
    h2 = jnp.maximum(h2, 0.0)

    # ----- decoder layer 2: Linear(n_hidden, n_features) + Sigmoid -----
    # W4/b4 are zero-padded to 128 lanes -> lane-dense output store.
    logits = jnp.dot(h2, w4p_ref[...], preferred_element_type=jnp.float32) + b4p_ref[...]
    recon_ref[...] = jax.nn.sigmoid(logits)

    # fused (mu | log_var) output
    mulv_ref[:, :latent_dim] = mu
    mulv_ref[:, latent_dim:] = log_var


@functools.partial(jax.jit, static_argnames=("tile_b",))
def cvae_forward(x, c, eps, kparams, tile_b=2048):
    """Runs the CVAE forward pass. Returns (recon, mu, log_var)."""
    B = x.shape[0]
    (w1, b1, w2mu, w2lv, b2mu, b2lv, w3z, w3c, b3, w4p, b4p) = kparams

    # encoder input concat done once in the wrapper (fused matmul in kernel)
    xc = jnp.concatenate([x, c], axis=1)

    # choose batch tile: large enough to amortize per-step overhead, small
    # enough for v7x's 64 MiB VMEM (per-row footprint ~1 KB f32, double-buffered)
    TB = min(tile_b, _round_up(B, 8))
    B_pad = _round_up(B, TB)
    if B_pad != B:
        pad = B_pad - B
        xc = jnp.pad(xc, ((0, pad), (0, 0)))
        c_in = jnp.pad(c, ((0, pad), (0, 0)))
        eps_in = jnp.pad(eps, ((0, pad), (0, 0)))
    else:
        c_in, eps_in = c, eps

    grid = (B_pad // TB,)

    def act_spec(feat):
        # per-batch-tile block, marches along the grid
        return pl.BlockSpec((TB, feat), lambda i: (i, 0))

    def const_spec(shape):
        # constant block index -> stays VMEM-resident across iterations
        return pl.BlockSpec(shape, lambda i: (0, 0))

    in_specs = [
        act_spec(n_features + n_classes),   # xc
        act_spec(n_classes),                # c
        act_spec(latent_dim),               # eps
        const_spec(w1.shape), const_spec(b1.shape),
        const_spec(w2mu.shape), const_spec(w2lv.shape),
        const_spec(b2mu.shape), const_spec(b2lv.shape),
        const_spec(w3z.shape), const_spec(w3c.shape), const_spec(b3.shape),
        const_spec(w4p.shape), const_spec(b4p.shape),
    ]

    out_shapes = (
        jax.ShapeDtypeStruct((B_pad, RECON_PAD), jnp.float32),       # recon (padded lanes)
        jax.ShapeDtypeStruct((B_pad, 2 * latent_dim), jnp.float32),  # fused [mu | log_var]
    )
    out_specs = (
        act_spec(RECON_PAD),
        act_spec(2 * latent_dim),
    )

    recon_pad, mulv = pl.pallas_call(
        cvae_kernel,
        grid=grid,
        in_specs=in_specs,
        out_specs=out_specs,
        out_shape=out_shapes,
        compiler_params=pltpu.CompilerParams(
            dimension_semantics=("parallel",),
            vmem_limit_bytes=32 * 1024 * 1024,
        ),
    )(xc, c_in, eps_in,
      w1, b1, w2mu, w2lv, b2mu, b2lv, w3z, w3c, b3, w4p, b4p)

    recon = recon_pad[:B, :n_features]
    mu = mulv[:B, :latent_dim]
    log_var = mulv[:B, latent_dim:]
    return recon, mu, log_var


def init_params(key):
    """PyTorch-style Linear init (U(-1/sqrt(fan_in), +)); weights as [in, out]."""
    ks = jax.random.split(key, 4)

    def lin(k, fan_in, fan_out):
        kw, kb = jax.random.split(k)
        bound = 1.0 / jnp.sqrt(fan_in)
        w = jax.random.uniform(kw, (fan_in, fan_out), jnp.float32, -bound, bound)
        b = jax.random.uniform(kb, (1, fan_out), jnp.float32, -bound, bound)
        return w, b

    w1, b1 = lin(ks[0], n_features + n_classes, n_hidden)   # encoder Linear 1
    w2, b2 = lin(ks[1], n_hidden, 2 * latent_dim)            # encoder Linear 2
    w3, b3 = lin(ks[2], latent_dim + n_classes, n_hidden)    # decoder Linear 1
    w4, b4 = lin(ks[3], n_hidden, n_features)                # decoder Linear 2
    return (w1, b1, w2, b2, w3, b3, w4, b4)


def prepare_kernel_params(raw):
    """Split / pad the raw (PyTorch-layout) params for the kernel."""
    (w1, b1, w2, b2, w3, b3, w4, b4) = raw
    w2mu, w2lv = w2[:, :latent_dim], w2[:, latent_dim:]
    b2mu, b2lv = b2[:, :latent_dim], b2[:, latent_dim:]
    w3z, w3c = w3[:latent_dim], w3[latent_dim:]
    w4p = jnp.zeros((n_hidden, RECON_PAD), jnp.float32).at[:, :n_features].set(w4)
    b4p = jnp.zeros((1, RECON_PAD), jnp.float32).at[:, :n_features].set(b4)
    return (w1, b1, w2mu, w2lv, b2mu, b2lv, w3z, w3c, b3, w4p, b4p)


if __name__ == "__main__":
    key = jax.random.PRNGKey(0)
    k_param, k_x, k_c, k_eps = jax.random.split(key, 4)

    B = 8
    raw_params = init_params(k_param)
    kparams = prepare_kernel_params(raw_params)

    x = jax.random.uniform(k_x, (B, n_features), jnp.float32)
    labels = jax.random.randint(k_c, (B,), 0, n_classes)
    c = jax.nn.one_hot(labels, n_classes, dtype=jnp.float32)
    # eps drawn outside the kernel (torch.randn_like equivalent), passed in
    # for determinism.
    eps = jax.random.normal(k_eps, (B, latent_dim), jnp.float32)

    recon, mu, log_var = cvae_forward(x, c, eps, kparams)
    jax.block_until_ready((recon, mu, log_var))

    # pure-JAX reference using the raw (un-split, un-padded) params
    (w1, b1, w2, b2, w3, b3, w4, b4) = raw_params
    xc_r = jnp.concatenate([x, c], axis=1)
    h_r = jnp.maximum(xc_r @ w1 + b1, 0.0)
    z2_r = h_r @ w2 + b2
    mu_r, lv_r = z2_r[:, :latent_dim], z2_r[:, latent_dim:]
    z_r = eps * jnp.exp(0.5 * lv_r) + mu_r
    zc_r = jnp.concatenate([z_r, c], axis=1)
    h2_r = jnp.maximum(zc_r @ w3 + b3, 0.0)
    recon_r = jax.nn.sigmoid(h2_r @ w4 + b4)

    assert jnp.allclose(recon, recon_r, atol=1e-5), "recon mismatch"
    assert jnp.allclose(mu, mu_r, atol=1e-5), "mu mismatch"
    assert jnp.allclose(log_var, lv_r, atol=1e-5), "log_var mismatch"

    print("KERNEL_OK")
</pallas_src>

<mosaic_0001>
module attributes {stable_mosaic.version = 11 : i64} {
  func.func @cvae_kernel(%arg0: i32, %arg1: memref<8x105xf32, #tpu.memory_space<vmem>>, %arg2: memref<8x5xf32, #tpu.memory_space<vmem>>, %arg3: memref<8x10xf32, #tpu.memory_space<vmem>>, %arg4: memref<105x20xf32, #tpu.memory_space<vmem>>, %arg5: memref<1x20xf32, #tpu.memory_space<vmem>>, %arg6: memref<20x10xf32, #tpu.memory_space<vmem>>, %arg7: memref<20x10xf32, #tpu.memory_space<vmem>>, %arg8: memref<1x10xf32, #tpu.memory_space<vmem>>, %arg9: memref<1x10xf32, #tpu.memory_space<vmem>>, %arg10: memref<10x20xf32, #tpu.memory_space<vmem>>, %arg11: memref<5x20xf32, #tpu.memory_space<vmem>>, %arg12: memref<1x20xf32, #tpu.memory_space<vmem>>, %arg13: memref<20x128xf32, #tpu.memory_space<vmem>>, %arg14: memref<1x128xf32, #tpu.memory_space<vmem>>, %arg15: memref<8x128xf32, #tpu.memory_space<vmem>>, %arg16: memref<8x20xf32, #tpu.memory_space<vmem>>) attributes {dimension_semantics = [#tpu.dimension_semantics<parallel>], iteration_bounds = array<i64: 1>, scalar_prefetch = 0 : i64, scratch_operands = 0 : i64, tpu.core_type = #tpu.core_type<tc>, window_params = [{transform_indices = @transform_0, window_bounds = array<i64: 8, 105>}, {transform_indices = @transform_1, window_bounds = array<i64: 8, 5>}, {transform_indices = @transform_2, window_bounds = array<i64: 8, 10>}, {pipeline_mode = #tpu.pipeline_mode<synchronous>, transform_indices = @transform_3, window_bounds = array<i64: 105, 20>}, {pipeline_mode = #tpu.pipeline_mode<synchronous>, transform_indices = @transform_4, window_bounds = array<i64: 1, 20>}, {pipeline_mode = #tpu.pipeline_mode<synchronous>, transform_indices = @transform_5, window_bounds = array<i64: 20, 10>}, {pipeline_mode = #tpu.pipeline_mode<synchronous>, transform_indices = @transform_6, window_bounds = array<i64: 20, 10>}, {pipeline_mode = #tpu.pipeline_mode<synchronous>, transform_indices = @transform_7, window_bounds = array<i64: 1, 10>}, {pipeline_mode = #tpu.pipeline_mode<synchronous>, transform_indices = @transform_8, window_bounds = array<i64: 1, 10>}, {pipeline_mode = #tpu.pipeline_mode<synchronous>, transform_indices = @transform_9, window_bounds = array<i64: 10, 20>}, {pipeline_mode = #tpu.pipeline_mode<synchronous>, transform_indices = @transform_10, window_bounds = array<i64: 5, 20>}, {pipeline_mode = #tpu.pipeline_mode<synchronous>, transform_indices = @transform_11, window_bounds = array<i64: 1, 20>}, {pipeline_mode = #tpu.pipeline_mode<synchronous>, transform_indices = @transform_12, window_bounds = array<i64: 20, 128>}, {pipeline_mode = #tpu.pipeline_mode<synchronous>, transform_indices = @transform_13, window_bounds = array<i64: 1, 128>}, {transform_indices = @transform_14, window_bounds = array<i64: 8, 128>}, {transform_indices = @transform_15, window_bounds = array<i64: 8, 20>}]} {
    %c0 = arith.constant 0 : index
    %c0_0 = arith.constant 0 : index
    %0 = vector.load %arg1[%c0, %c0_0] : memref<8x105xf32, #tpu.memory_space<vmem>>, vector<8x105xf32>
    %c0_1 = arith.constant 0 : index
    %c0_2 = arith.constant 0 : index
    %1 = vector.load %arg2[%c0_1, %c0_2] : memref<8x5xf32, #tpu.memory_space<vmem>>, vector<8x5xf32>
    %c0_3 = arith.constant 0 : index
    %c0_4 = arith.constant 0 : index
    %2 = vector.load %arg4[%c0_3, %c0_4] : memref<105x20xf32, #tpu.memory_space<vmem>>, vector<105x20xf32>
    %cst = arith.constant dense<0.000000e+00> : vector<8x20xf32>
    %3 = tpu.matmul %0, %2, %cst {dimension_numbers = #tpu.dot_dimension_numbers<[1], [0], [0], [1], [0, 0, 1, 1], [], []>} : vector<8x105xf32>, vector<105x20xf32>, vector<8x20xf32> -> vector<8x20xf32>
    %c0_5 = arith.constant 0 : index
    %c0_6 = arith.constant 0 : index
    %4 = vector.load %arg5[%c0_5, %c0_6] : memref<1x20xf32, #tpu.memory_space<vmem>>, vector<1x20xf32>
    %5 = vector.broadcast %4 : vector<1x20xf32> to vector<8x20xf32>
    %6 = arith.addf %3, %5 : vector<8x20xf32>
    %cst_7 = arith.constant 0.000000e+00 : f32
    %7 = vector.broadcast %cst_7 : f32 to vector<8x20xf32>
    %8 = arith.maximumf %6, %7 : vector<8x20xf32>
    %c0_8 = arith.constant 0 : index
    %c0_9 = arith.constant 0 : index
    %9 = vector.load %arg6[%c0_8, %c0_9] : memref<20x10xf32, #tpu.memory_space<vmem>>, vector<20x10xf32>
    %cst_10 = arith.constant dense<0.000000e+00> : vector<8x10xf32>
    %10 = tpu.matmul %8, %9, %cst_10 {dimension_numbers = #tpu.dot_dimension_numbers<[1], [0], [0], [1], [0, 0, 1, 1], [], []>} : vector<8x20xf32>, vector<20x10xf32>, vector<8x10xf32> -> vector<8x10xf32>
    %c0_11 = arith.constant 0 : index
    %c0_12 = arith.constant 0 : index
    %11 = vector.load %arg8[%c0_11, %c0_12] : memref<1x10xf32, #tpu.memory_space<vmem>>, vector<1x10xf32>
    %12 = vector.broadcast %11 : vector<1x10xf32> to vector<8x10xf32>
    %13 = arith.addf %10, %12 : vector<8x10xf32>
    %c0_13 = arith.constant 0 : index
    %c0_14 = arith.constant 0 : index
    %14 = vector.load %arg7[%c0_13, %c0_14] : memref<20x10xf32, #tpu.memory_space<vmem>>, vector<20x10xf32>
    %cst_15 = arith.constant dense<0.000000e+00> : vector<8x10xf32>
    %15 = tpu.matmul %8, %14, %cst_15 {dimension_numbers = #tpu.dot_dimension_numbers<[1], [0], [0], [1], [0, 0, 1, 1], [], []>} : vector<8x20xf32>, vector<20x10xf32>, vector<8x10xf32> -> vector<8x10xf32>
    %c0_16 = arith.constant 0 : index
    %c0_17 = arith.constant 0 : index
    %16 = vector.load %arg9[%c0_16, %c0_17] : memref<1x10xf32, #tpu.memory_space<vmem>>, vector<1x10xf32>
    %17 = vector.broadcast %16 : vector<1x10xf32> to vector<8x10xf32>
    %18 = arith.addf %15, %17 : vector<8x10xf32>
    %c0_18 = arith.constant 0 : index
    %c0_19 = arith.constant 0 : index
    %19 = vector.load %arg3[%c0_18, %c0_19] : memref<8x10xf32, #tpu.memory_space<vmem>>, vector<8x10xf32>
    %cst_20 = arith.constant 5.000000e-01 : f32
    %20 = vector.broadcast %cst_20 : f32 to vector<8x10xf32>
    %21 = arith.mulf %20, %18 : vector<8x10xf32>
    %22 = math.exp %21 : vector<8x10xf32>
    %23 = arith.mulf %19, %22 : vector<8x10xf32>
    %24 = arith.addf %23, %13 : vector<8x10xf32>
    %c0_21 = arith.constant 0 : index
    %c0_22 = arith.constant 0 : index
    %25 = vector.load %arg10[%c0_21, %c0_22] : memref<10x20xf32, #tpu.memory_space<vmem>>, vector<10x20xf32>
    %cst_23 = arith.constant dense<0.000000e+00> : vector<8x20xf32>
    %26 = tpu.matmul %24, %25, %cst_23 {dimension_numbers = #tpu.dot_dimension_numbers<[1], [0], [0], [1], [0, 0, 1, 1], [], []>} : vector<8x10xf32>, vector<10x20xf32>, vector<8x20xf32> -> vector<8x20xf32>
    %c0_24 = arith.constant 0 : index
    %c0_25 = arith.constant 0 : index
    %27 = vector.load %arg11[%c0_24, %c0_25] : memref<5x20xf32, #tpu.memory_space<vmem>>, vector<5x20xf32>
    %cst_26 = arith.constant dense<0.000000e+00> : vector<8x20xf32>
    %28 = tpu.matmul %1, %27, %cst_26 {dimension_numbers = #tpu.dot_dimension_numbers<[1], [0], [0], [1], [0, 0, 1, 1], [], []>} : vector<8x5xf32>, vector<5x20xf32>, vector<8x20xf32> -> vector<8x20xf32>
    %29 = arith.addf %26, %28 : vector<8x20xf32>
    %c0_27 = arith.constant 0 : index
    %c0_28 = arith.constant 0 : index
    %30 = vector.load %arg12[%c0_27, %c0_28] : memref<1x20xf32, #tpu.memory_space<vmem>>, vector<1x20xf32>
    %31 = vector.broadcast %30 : vector<1x20xf32> to vector<8x20xf32>
    %32 = arith.addf %29, %31 : vector<8x20xf32>
    %cst_29 = arith.constant 0.000000e+00 : f32
    %33 = vector.broadcast %cst_29 : f32 to vector<8x20xf32>
    %34 = arith.maximumf %32, %33 : vector<8x20xf32>
    %c0_30 = arith.constant 0 : index
    %c0_31 = arith.constant 0 : index
    %35 = vector.load %arg13[%c0_30, %c0_31] : memref<20x128xf32, #tpu.memory_space<vmem>>, vector<20x128xf32>
    %cst_32 = arith.constant dense<0.000000e+00> : vector<8x128xf32>
    %36 = tpu.matmul %34, %35, %cst_32 {dimension_numbers = #tpu.dot_dimension_numbers<[1], [0], [0], [1], [0, 0, 1, 1], [], []>} : vector<8x20xf32>, vector<20x128xf32>, vector<8x128xf32> -> vector<8x128xf32>
    %c0_33 = arith.constant 0 : index
    %c0_34 = arith.constant 0 : index
    %37 = vector.load %arg14[%c0_33, %c0_34] : memref<1x128xf32, #tpu.memory_space<vmem>>, vector<1x128xf32>
    %38 = vector.broadcast %37 : vector<1x128xf32> to vector<8x128xf32>
    %39 = arith.addf %36, %38 : vector<8x128xf32>
    %40 = arith.negf %39 : vector<8x128xf32>
    %41 = math.exp %40 : vector<8x128xf32>
    %cst_35 = arith.constant 1.000000e+00 : f32
    %42 = vector.broadcast %cst_35 : f32 to vector<8x128xf32>
    %43 = arith.addf %42, %41 : vector<8x128xf32>
    %44 = arith.divf %42, %43 : vector<8x128xf32>
    %c0_36 = arith.constant 0 : index
    %c0_37 = arith.constant 0 : index
    %45 = vector.load %arg15[%c0_36, %c0_37] : memref<8x128xf32, #tpu.memory_space<vmem>>, vector<8x128xf32>
    tpu.vector_store %arg15[%c0_36, %c0_37], %44 {strides = array<i32>} : memref<8x128xf32, #tpu.memory_space<vmem>>, vector<8x128xf32>,
    %c0_38 = arith.constant 0 : index
    %c0_39 = arith.constant 0 : index
    %46 = vector.load %arg16[%c0_38, %c0_39] : memref<8x20xf32, #tpu.memory_space<vmem>>, vector<8x10xf32>
    tpu.vector_store %arg16[%c0_38, %c0_39], %13 {strides = array<i32>} : memref<8x20xf32, #tpu.memory_space<vmem>>, vector<8x10xf32>,
    %c0_40 = arith.constant 0 : index
    %c10 = arith.constant 10 : index
    %47 = vector.load %arg16[%c0_40, %c10] : memref<8x20xf32, #tpu.memory_space<vmem>>, vector<8x10xf32>
    tpu.vector_store %arg16[%c0_40, %c10], %18 {strides = array<i32>} : memref<8x20xf32, #tpu.memory_space<vmem>>, vector<8x10xf32>,
    return
  }
  func.func @transform_0(%arg0: i32) -> (i32, i32) {
    %c0_i32 = arith.constant 0 : i32
    %c0_i32_0 = arith.constant 0 : i32
    return %arg0, %c0_i32 : i32, i32
  }
  func.func @transform_1(%arg0: i32) -> (i32, i32) {
    %c0_i32 = arith.constant 0 : i32
    %c0_i32_0 = arith.constant 0 : i32
    return %arg0, %c0_i32 : i32, i32
  }
  func.func @transform_2(%arg0: i32) -> (i32, i32) {
    %c0_i32 = arith.constant 0 : i32
    %c0_i32_0 = arith.constant 0 : i32
    return %arg0, %c0_i32 : i32, i32
  }
  func.func @transform_3(%arg0: i32) -> (i32, i32) {
    %c0_i32 = arith.constant 0 : i32
    %c0_i32_0 = arith.constant 0 : i32
    %c0_i32_1 = arith.constant 0 : i32
    return %c0_i32, %c0_i32_0 : i32, i32
  }
  func.func @transform_4(%arg0: i32) -> (i32, i32) {
    %c0_i32 = arith.constant 0 : i32
    %c0_i32_0 = arith.constant 0 : i32
    %c0_i32_1 = arith.constant 0 : i32
    return %c0_i32, %c0_i32_0 : i32, i32
  }
  func.func @transform_5(%arg0: i32) -> (i32, i32) {
    %c0_i32 = arith.constant 0 : i32
    %c0_i32_0 = arith.constant 0 : i32
    %c0_i32_1 = arith.constant 0 : i32
    return %c0_i32, %c0_i32_0 : i32, i32
  }
  func.func @transform_6(%arg0: i32) -> (i32, i32) {
    %c0_i32 = arith.constant 0 : i32
    %c0_i32_0 = arith.constant 0 : i32
    %c0_i32_1 = arith.constant 0 : i32
    return %c0_i32, %c0_i32_0 : i32, i32
  }
  func.func @transform_7(%arg0: i32) -> (i32, i32) {
    %c0_i32 = arith.constant 0 : i32
    %c0_i32_0 = arith.constant 0 : i32
    %c0_i32_1 = arith.constant 0 : i32
    return %c0_i32, %c0_i32_0 : i32, i32
  }
  func.func @transform_8(%arg0: i32) -> (i32, i32) {
    %c0_i32 = arith.constant 0 : i32
    %c0_i32_0 = arith.constant 0 : i32
    %c0_i32_1 = arith.constant 0 : i32
    return %c0_i32, %c0_i32_0 : i32, i32
  }
  func.func @transform_9(%arg0: i32) -> (i32, i32) {
    %c0_i32 = arith.constant 0 : i32
    %c0_i32_0 = arith.constant 0 : i32
    %c0_i32_1 = arith.constant 0 : i32
    return %c0_i32, %c0_i32_0 : i32, i32
  }
  func.func @transform_10(%arg0: i32) -> (i32, i32) {
    %c0_i32 = arith.constant 0 : i32
    %c0_i32_0 = arith.constant 0 : i32
    %c0_i32_1 = arith.constant 0 : i32
    return %c0_i32, %c0_i32_0 : i32, i32
  }
  func.func @transform_11(%arg0: i32) -> (i32, i32) {
    %c0_i32 = arith.constant 0 : i32
    %c0_i32_0 = arith.constant 0 : i32
    %c0_i32_1 = arith.constant 0 : i32
    return %c0_i32, %c0_i32_0 : i32, i32
  }
  func.func @transform_12(%arg0: i32) -> (i32, i32) {
    %c0_i32 = arith.constant 0 : i32
    %c0_i32_0 = arith.constant 0 : i32
    %c0_i32_1 = arith.constant 0 : i32
    return %c0_i32, %c0_i32_0 : i32, i32
  }
  func.func @transform_13(%arg0: i32) -> (i32, i32) {
    %c0_i32 = arith.constant 0 : i32
    %c0_i32_0 = arith.constant 0 : i32
    %c0_i32_1 = arith.constant 0 : i32
    return %c0_i32, %c0_i32_0 : i32, i32
  }
  func.func @transform_14(%arg0: i32) -> (i32, i32) {
    %c0_i32 = arith.constant 0 : i32
    %c0_i32_0 = arith.constant 0 : i32
    return %arg0, %c0_i32 : i32, i32
  }
  func.func @transform_15(%arg0: i32) -> (i32, i32) {
    %c0_i32 = arith.constant 0 : i32
    %c0_i32_0 = arith.constant 0 : i32
    return %arg0, %c0_i32 : i32, i32
  }
}

</mosaic_0001>

<llo_original>
// kernel: cvae_forward.1
$region0: #{cvae_forward.1}
  #allocation0 [shape = 'u32[]', space=smem, size = 0x4, offset = 0x4, fixed_abs, tag = 'smem constant byte address 0x4 - core index']
  #allocation1 [shape = 'u32[144,128]{1,0:T(1,128)}', space=vmem, size = 0x12000, scoped, tag = 'internal scratch']
  %s0 = inlined_call_operand.vmem [shape: f32[8,105], index: 0, kind: input, shape index: {}]
  %s1 = inlined_call_operand.vmem [shape: f32[8,5], index: 1, kind: input, shape index: {}]
  %s2 = inlined_call_operand.vmem [shape: f32[8,10], index: 2, kind: input, shape index: {}]
  %s3 = inlined_call_operand.vmem [shape: f32[105,20], index: 3, kind: input, shape index: {}]
  %s4 = inlined_call_operand.vmem [shape: f32[1,20], index: 4, kind: input, shape index: {}]
  %s5 = inlined_call_operand.vmem [shape: f32[20,10], index: 5, kind: input, shape index: {}]
  %s6 = inlined_call_operand.vmem [shape: f32[20,10], index: 6, kind: input, shape index: {}]
  %s7 = inlined_call_operand.vmem [shape: f32[1,10], index: 7, kind: input, shape index: {}]
  %s8 = inlined_call_operand.vmem [shape: f32[1,10], index: 8, kind: input, shape index: {}]
  %s9 = inlined_call_operand.vmem [shape: f32[10,20], index: 9, kind: input, shape index: {}]
  %s10 = inlined_call_operand.vmem [shape: f32[5,20], index: 10, kind: input, shape index: {}]
  %s11 = inlined_call_operand.vmem [shape: f32[1,20], index: 11, kind: input, shape index: {}]
  %s12 = inlined_call_operand.vmem [shape: f32[20,128], index: 12, kind: input, shape index: {}]
  %s13 = inlined_call_operand.vmem [shape: f32[1,128], index: 13, kind: input, shape index: {}]
  %s14 = inlined_call_operand.hbm [shape: f32[8,128], index: 14, kind: output, shape index: {0}]
  %s15 = inlined_call_operand.vmem [shape: f32[8,20], index: 15, kind: output, shape index: {1}]
  %16 = xla_tuple %s14, %s15
  %s17 = sld [smem:[#allocation0]]
  $region74: #{cvae_forward.1} parent=0
    _
  %s19 = ssub.s32 1, %s17
  %s20 = scalar_select 0, %s19, %s17
  $region1: #{cvae_forward.1} parent=0
    #allocation2 [shape = 'u8[4096]{0}', space=vmem, size = 0x1000, scoped, tag = 'output window, operand 0, single buffered']
    #allocation3 [shape = 's32[1]{0}', space=sflag, size = 0x4, scoped, tag = 'scoped memory for cvae_forward.1']
    %21 = vsyncpa [#allocation3], 0
    // Predicated region
    $region2: #{cvae_forward.1} parent=1 // pred_check
      _
    $region3: #{cvae_forward.1} parent=1 // pred_check_branch
      %23 = sbr.rel (0) target = $region5
    $region4: #{cvae_forward.1} parent=1 // pred_region
      _
    $region5: #{cvae_forward.1} parent=1 // pred_fallthru
      _
    // Predicated region
    $region6: #{cvae_forward.1} parent=1 // pred_check
      _
    $region7: #{cvae_forward.1} parent=1 // pred_check_branch
      %25 = sbr.rel (0) target = $region9
    $region8: #{cvae_forward.1} parent=1 // pred_region
      _
    $region9: #{cvae_forward.1} parent=1 // pred_fallthru
      _
    // Predicated region
    $region10: #{cvae_forward.1} parent=1 // pred_check
      _
    $region11: #{cvae_forward.1} parent=1 // pred_check_branch
      %27 = sbr.rel (0) target = $region13
    $region12: #{cvae_forward.1} parent=1 // pred_region
      _
    $region13: #{cvae_forward.1} parent=1 // pred_fallthru
      _
    // Predicated region
    $region14: #{cvae_forward.1} parent=1 // pred_check
      _
    $region15: #{cvae_forward.1} parent=1 // pred_check_branch
      %29 = sbr.rel (0) target = $region17
    $region16: #{cvae_forward.1} parent=1 // pred_region
      _
    $region17: #{cvae_forward.1} parent=1 // pred_fallthru
      _
    // Predicated region
    $region18: #{cvae_forward.1} parent=1 // pred_check
      _
    $region19: #{cvae_forward.1} parent=1 // pred_check_branch
      %31 = sbr.rel (0) target = $region21
    $region20: #{cvae_forward.1} parent=1 // pred_region
      _
    $region21: #{cvae_forward.1} parent=1 // pred_fallthru
      _
    // Predicated region
    $region22: #{cvae_forward.1} parent=1 // pred_check
      _
    $region23: #{cvae_forward.1} parent=1 // pred_check_branch
      %33 = sbr.rel (0) target = $region25
    $region24: #{cvae_forward.1} parent=1 // pred_region
      _
    $region25: #{cvae_forward.1} parent=1 // pred_fallthru
      _
    // Predicated region
    $region26: #{cvae_forward.1} parent=1 // pred_check
      _
    $region27: #{cvae_forward.1} parent=1 // pred_check_branch
      %35 = sbr.rel (0) target = $region29
    $region28: #{cvae_forward.1} parent=1 // pred_region
      _
    $region29: #{cvae_forward.1} parent=1 // pred_fallthru
      _
    // Predicated region
    $region30: #{cvae_forward.1} parent=1 // pred_check
      _
    $region31: #{cvae_forward.1} parent=1 // pred_check_branch
      %37 = sbr.rel (0) target = $region33
    $region32: #{cvae_forward.1} parent=1 // pred_region
      _
    $region33: #{cvae_forward.1} parent=1 // pred_fallthru
      _
    // Predicated region
    $region34: #{cvae_forward.1} parent=1 // pred_check
      _
    $region35: #{cvae_forward.1} parent=1 // pred_check_branch
      %39 = sbr.rel (0) target = $region37
    $region36: #{cvae_forward.1} parent=1 // pred_region
      _
    $region37: #{cvae_forward.1} parent=1 // pred_fallthru
      _
    // Predicated region
    $region38: #{cvae_forward.1} parent=1 // pred_check
      _
    $region39: #{cvae_forward.1} parent=1 // pred_check_branch
      %41 = sbr.rel (0) target = $region41
    $region40: #{cvae_forward.1} parent=1 // pred_region
      _
    $region41: #{cvae_forward.1} parent=1 // pred_fallthru
      _
    // Predicated region
    $region42: #{cvae_forward.1} parent=1 // pred_check
      _
    $region43: #{cvae_forward.1} parent=1 // pred_check_branch
      %43 = sbr.rel (0) target = $region45
    $region44: #{cvae_forward.1} parent=1 // pred_region
      _
    $region45: #{cvae_forward.1} parent=1 // pred_fallthru
      _
    // Predicated region
    $region46: #{cvae_forward.1} parent=1 // pred_check
      _
    $region47: #{cvae_forward.1} parent=1 // pred_check_branch
      %45 = sbr.rel (0) target = $region49
    $region48: #{cvae_forward.1} parent=1 // pred_region
      _
    $region49: #{cvae_forward.1} parent=1 // pred_fallthru
      _
    // Predicated region
    $region50: #{cvae_forward.1} parent=1 // pred_check
      _
    $region51: #{cvae_forward.1} parent=1 // pred_check_branch
      %47 = sbr.rel (0) target = $region53
    $region52: #{cvae_forward.1} parent=1 // pred_region
      _
    $region53: #{cvae_forward.1} parent=1 // pred_fallthru
      _
    // Predicated region
    $region54: #{cvae_forward.1} parent=1 // pred_check
      _
    $region55: #{cvae_forward.1} parent=1 // pred_check_branch
      %49 = sbr.rel (0) target = $region57
    $region56: #{cvae_forward.1} parent=1 // pred_region
      _
    $region57: #{cvae_forward.1} parent=1 // pred_fallthru
      _
    %v50 = vld [vmem:[%s0] sm:$0xff]
    %v51 = vld [vmem:[%s1] sm:$0xff]
    %v52 = vld [vmem:[%s3] sm:$0xff]
    %v53 = vld [vmem:[%s3 + $0x8] sm:$0xff]
    %v54 = vld [vmem:[%s3 + $0x10] sm:$0xff]
    %v55 = vld [vmem:[%s3 + $0x18] sm:$0xff]
    %v56 = vld [vmem:[%s3 + $0x20] sm:$0xff]
    %v57 = vld [vmem:[%s3 + $0x28] sm:$0xff]
    %v58 = vld [vmem:[%s3 + $0x30] sm:$0xff]
    %v59 = vld [vmem:[%s3 + $0x38] sm:$0xff]
    %v60 = vld [vmem:[%s3 + $0x40] sm:$0xff]
    %v61 = vld [vmem:[%s3 + $0x48] sm:$0xff]
    %v62 = vld [vmem:[%s3 + $0x50] sm:$0xff]
    %v63 = vld [vmem:[%s3 + $0x58] sm:$0xff]
    %v64 = vld [vmem:[%s3 + $0x60] sm:$0xff]
    %v65 = vld [vmem:[%s3 + $0x68] sm:$0x1]
    %v66 = vld [vmem:[%s4] sm:$0x1]
    %v68 = vlaneseq
    %v69 = vshrl.u32 %v68, 7
    %v70 = vsub.s32 0, %v69
    %v71 = vrot.slane %v66, %v70
    %vm73 = vcmask 859136
    %v75 = vsel %vm73, %v50, 0
    %vm77 = vcmask 1040384
    %v79 = vsel %vm77, %v65, 0
    %81 = vmatprep.subr.mxu0 0.0
    %82 = vmatpush1.msra.mxu0 0.0
    %83 = vmatprep.subr.mxu0 0.0
    %84 = vmatpush1.msra.mxu0 0.0
    %85 = vmatprep.subr.mxu0 0.0
    %86 = vmatpush1.msra.mxu0 %v79
    %87 = vmatprep.subr.mxu0 0.0
    %88 = vmatpush1.msra.mxu0 %v64
    %89 = vmatprep.subr.mxu0 0.0
    %90 = vmatpush1.msra.mxu0 %v63
    %91 = vmatprep.subr.mxu0 0.0
    %92 = vmatpush1.msra.mxu0 %v62
    %93 = vmatprep.subr.mxu0 0.0
    %94 = vmatpush1.msra.mxu0 %v61
    %95 = vmatprep.subr.mxu0 0.0
    %96 = vmatpush1.msra.mxu0 %v60
    %97 = vmatprep.subr.mxu0 0.0
    %98 = vmatpush1.msra.mxu0 %v59
    %99 = vmatprep.subr.mxu0 0.0
    %100 = vmatpush1.msra.mxu0 %v58
    %101 = vmatprep.subr.mxu0 0.0
    %102 = vmatpush1.msra.mxu0 %v57
    %103 = vmatprep.subr.mxu0 0.0
    %104 = vmatpush1.msra.mxu0 %v56
    %105 = vmatprep.subr.mxu0 0.0
    %106 = vmatpush1.msra.mxu0 %v55
    %107 = vmatprep.subr.mxu0 0.0
    %108 = vmatpush1.msra.mxu0 %v54
    %109 = vmatprep.subr.mxu0 0.0
    %110 = vmatpush1.msra.mxu0 %v53
    %111 = vmatprep.subr.mxu0 0.0
    %112 = vmatpush1.msra.mxu0 %v52
    %113 = vmatprep.subr.mxu0 0.0
    %114 = vmatpush2.msra.mxu0 0.0
    %115 = vmatprep.subr.mxu0 0.0
    %116 = vmatpush2.msra.mxu0 0.0
    %117 = vmatprep.subr.mxu0 0.0
    %118 = vmatpush2.msra.mxu0 0.0
    %119 = vmatprep.subr.mxu0 0.0
    %120 = vmatpush2.msra.mxu0 0.0
    %121 = vmatprep.subr.mxu0 0.0
    %122 = vmatpush2.msra.mxu0 0.0
    %123 = vmatprep.subr.mxu0 0.0
    %124 = vmatpush2.msra.mxu0 0.0
    %125 = vmatprep.subr.mxu0 0.0
    %126 = vmatpush2.msra.mxu0 0.0
    %127 = vmatprep.subr.mxu0 0.0
    %128 = vmatpush2.msra.mxu0 0.0
    %129 = vmatprep.subr.mxu0 0.0
    %130 = vmatpush2.msra.mxu0 0.0
    %131 = vmatprep.subr.mxu0 0.0
    %132 = vmatpush2.msra.mxu0 0.0
    %133 = vmatprep.subr.mxu0 0.0
    %134 = vmatpush2.msra.mxu0 0.0
    %135 = vmatprep.subr.mxu0 0.0
    %136 = vmatpush2.msra.mxu0 0.0
    %137 = vmatprep.subr.mxu0 0.0
    %138 = vmatpush2.msra.mxu0 0.0
    %139 = vmatprep.subr.mxu0 0.0
    %140 = vmatpush2.msra.mxu0 0.0
    %141 = vmatprep.subr.mxu0 0.0
    %142 = vmatpush2.msra.mxu0 0.0
    %143 = vmatprep.subr.mxu0 0.0
    %144 = vmatpush2.msra.mxu0 0.0
    %145 = vmatprep.mubr.f32.mxu0 0.0
    %146 = vmatmul.mubr.f32.gmra.mxu0 %v75
    %v147 = vpop.f32.mrf.mxu0
    %v148 = vadd.f32 %v71, %v147
    %v149 = vpop.f32.mrf.mxu0
    %150 = vdwg.mxu0
    %v151 = vmax.f32 %v148, 0.0
    %v152 = vld [vmem:[%s5] sm:$0xff]
    %v153 = vld [vmem:[%s5 + $0x8] sm:$0xff]
    %v154 = vld [vmem:[%s5 + $0x10] sm:$0xf]
    %v155 = vld [vmem:[%s7] sm:$0x1]
    %v157 = vlaneseq
    %v158 = vshrl.u32 %v157, 7
    %v159 = vsub.s32 0, %v158
    %v160 = vrot.slane %v155, %v159
    %vm162 = vcmask 162816
    %v164 = vsel %vm162, %v151, 0
    %vm166 = vcmask 1043456
    %v168 = vsel %vm166, %v154, 0
    %170 = vmatprep.subr.mxu0 0.0
    %171 = vmatpush1.msra.mxu0 0.0
    %172 = vmatprep.subr.mxu0 0.0
    %173 = vmatpush1.msra.mxu0 0.0
    %174 = vmatprep.subr.mxu0 0.0
    %175 = vmatpush1.msra.mxu0 0.0
    %176 = vmatprep.subr.mxu0 0.0
    %177 = vmatpush1.msra.mxu0 0.0
    %178 = vmatprep.subr.mxu0 0.0
    %179 = vmatpush1.msra.mxu0 0.0
    %180 = vmatprep.subr.mxu0 0.0
    %181 = vmatpush1.msra.mxu0 0.0
    %182 = vmatprep.subr.mxu0 0.0
    %183 = vmatpush1.msra.mxu0 0.0
    %184 = vmatprep.subr.mxu0 0.0
    %185 = vmatpush1.msra.mxu0 0.0
    %186 = vmatprep.subr.mxu0 0.0
    %187 = vmatpush1.msra.mxu0 0.0
    %188 = vmatprep.subr.mxu0 0.0
    %189 = vmatpush1.msra.mxu0 0.0
    %190 = vmatprep.subr.mxu0 0.0
    %191 = vmatpush1.msra.mxu0 0.0
    %192 = vmatprep.subr.mxu0 0.0
    %193 = vmatpush1.msra.mxu0 0.0
    %194 = vmatprep.subr.mxu0 0.0
    %195 = vmatpush1.msra.mxu0 0.0
    %196 = vmatprep.subr.mxu0 0.0
    %197 = vmatpush1.msra.mxu0 %v168
    %198 = vmatprep.subr.mxu0 0.0
    %199 = vmatpush1.msra.mxu0 %v153
    %200 = vmatprep.subr.mxu0 0.0
    %201 = vmatpush1.msra.mxu0 %v152
    %202 = vmatprep.subr.mxu0 0.0
    %203 = vmatpush2.msra.mxu0 0.0
    %204 = vmatprep.subr.mxu0 0.0
    %205 = vmatpush2.msra.mxu0 0.0
    %206 = vmatprep.subr.mxu0 0.0
    %207 = vmatpush2.msra.mxu0 0.0
    %208 = vmatprep.subr.mxu0 0.0
    %209 = vmatpush2.msra.mxu0 0.0
    %210 = vmatprep.subr.mxu0 0.0
    %211 = vmatpush2.msra.mxu0 0.0
    %212 = vmatprep.subr.mxu0 0.0
    %213 = vmatpush2.msra.mxu0 0.0
    %214 = vmatprep.subr.mxu0 0.0
    %215 = vmatpush2.msra.mxu0 0.0
    %216 = vmatprep.subr.mxu0 0.0
    %217 = vmatpush2.msra.mxu0 0.0
    %218 = vmatprep.subr.mxu0 0.0
    %219 = vmatpush2.msra.mxu0 0.0
    %220 = vmatprep.subr.mxu0 0.0
    %221 = vmatpush2.msra.mxu0 0.0
    %222 = vmatprep.subr.mxu0 0.0
    %223 = vmatpush2.msra.mxu0 0.0
    %224 = vmatprep.subr.mxu0 0.0
    %225 = vmatpush2.msra.mxu0 0.0
    %226 = vmatprep.subr.mxu0 0.0
    %227 = vmatpush2.msra.mxu0 0.0
    %228 = vmatprep.subr.mxu0 0.0
    %229 = vmatpush2.msra.mxu0 0.0
    %230 = vmatprep.subr.mxu0 0.0
    %231 = vmatpush2.msra.mxu0 0.0
    %232 = vmatprep.subr.mxu0 0.0
    %233 = vmatpush2.msra.mxu0 0.0
    %234 = vmatprep.mubr.f32.mxu0 0.0
    %235 = vmatmul.mubr.f32.gmra.mxu0 %v164
    %v236 = vpop.f32.mrf.mxu0
    %v237 = vadd.f32 %v160, %v236
    %v238 = vpop.f32.mrf.mxu0
    %239 = vdwg.mxu0
    %v240 = vld [vmem:[%s6] sm:$0xff]
    %v241 = vld [vmem:[%s6 + $0x8] sm:$0xff]
    %v242 = vld [vmem:[%s6 + $0x10] sm:$0xf]
    %v243 = vld [vmem:[%s8] sm:$0x1]
    %v245 = vlaneseq
    %v246 = vshrl.u32 %v245, 7
    %v247 = vsub.s32 0, %v246
    %v248 = vrot.slane %v243, %v247
    %v251 = vsel %vm166, %v242, 0
    %253 = vmatprep.subr.mxu0 0.0
    %254 = vmatpush1.msra.mxu0 0.0
    %255 = vmatprep.subr.mxu0 0.0
    %256 = vmatpush1.msra.mxu0 0.0
    %257 = vmatprep.subr.mxu0 0.0
    %258 = vmatpush1.msra.mxu0 0.0
    %259 = vmatprep.subr.mxu0 0.0
    %260 = vmatpush1.msra.mxu0 0.0
    %261 = vmatprep.subr.mxu0 0.0
    %262 = vmatpush1.msra.mxu0 0.0
    %263 = vmatprep.subr.mxu0 0.0
    %264 = vmatpush1.msra.mxu0 0.0
    %265 = vmatprep.subr.mxu0 0.0
    %266 = vmatpush1.msra.mxu0 0.0
    %267 = vmatprep.subr.mxu0 0.0
    %268 = vmatpush1.msra.mxu0 0.0
    %269 = vmatprep.subr.mxu0 0.0
    %270 = vmatpush1.msra.mxu0 0.0
    %271 = vmatprep.subr.mxu0 0.0
    %272 = vmatpush1.msra.mxu0 0.0
    %273 = vmatprep.subr.mxu0 0.0
    %274 = vmatpush1.msra.mxu0 0.0
    %275 = vmatprep.subr.mxu0 0.0
    %276 = vmatpush1.msra.mxu0 0.0
    %277 = vmatprep.subr.mxu0 0.0
    %278 = vmatpush1.msra.mxu0 0.0
    %279 = vmatprep.subr.mxu0 0.0
    %280 = vmatpush1.msra.mxu0 %v251
    %281 = vmatprep.subr.mxu0 0.0
    %282 = vmatpush1.msra.mxu0 %v241
    %283 = vmatprep.subr.mxu0 0.0
    %284 = vmatpush1.msra.mxu0 %v240
    %285 = vmatprep.subr.mxu0 0.0
    %286 = vmatpush2.msra.mxu0 0.0
    %287 = vmatprep.subr.mxu0 0.0
    %288 = vmatpush2.msra.mxu0 0.0
    %289 = vmatprep.subr.mxu0 0.0
    %290 = vmatpush2.msra.mxu0 0.0
    %291 = vmatprep.subr.mxu0 0.0
    %292 = vmatpush2.msra.mxu0 0.0
    %293 = vmatprep.subr.mxu0 0.0
    %294 = vmatpush2.msra.mxu0 0.0
    %295 = vmatprep.subr.mxu0 0.0
    %296 = vmatpush2.msra.mxu0 0.0
    %297 = vmatprep.subr.mxu0 0.0
    %298 = vmatpush2.msra.mxu0 0.0
    %299 = vmatprep.subr.mxu0 0.0
    %300 = vmatpush2.msra.mxu0 0.0
    %301 = vmatprep.subr.mxu0 0.0
    %302 = vmatpush2.msra.mxu0 0.0
    %303 = vmatprep.subr.mxu0 0.0
    %304 = vmatpush2.msra.mxu0 0.0
    %305 = vmatprep.subr.mxu0 0.0
    %306 = vmatpush2.msra.mxu0 0.0
    %307 = vmatprep.subr.mxu0 0.0
    %308 = vmatpush2.msra.mxu0 0.0
    %309 = vmatprep.subr.mxu0 0.0
    %310 = vmatpush2.msra.mxu0 0.0
    %311 = vmatprep.subr.mxu0 0.0
    %312 = vmatpush2.msra.mxu0 0.0
    %313 = vmatprep.subr.mxu0 0.0
    %314 = vmatpush2.msra.mxu0 0.0
    %315 = vmatprep.subr.mxu0 0.0
    %316 = vmatpush2.msra.mxu0 0.0
    %317 = vmatprep.mubr.f32.mxu0 0.0
    %318 = vmatmul.mubr.f32.gmra.mxu0 %v164
    %v319 = vpop.f32.mrf.mxu0
    %v320 = vadd.f32 %v248, %v319
    %v321 = vpop.f32.mrf.mxu0
    %322 = vdwg.mxu0
    %v323 = vld [vmem:[%s2] sm:$0xff]
    %v324 = vmul.f32 %v320, 0.5
    %v325 = vmul.f32 %v324, 1.442695
    %v326 = vpow.pop %v325
    %v327 = vmul.f32 %v323, %v326
    %v328 = vadd.f32 %v327, %v237
    %v329 = vld [vmem:[%s9] sm:$0xff]
    %v330 = vld [vmem:[%s9 + $0x8] sm:$0x3]
    %v331 = vld [vmem:[%s10] sm:$0x1f]
    %vm332 = vcmask 39936
    %v334 = vsel %vm332, %v51, 0
    %vm336 = vcmask 1044480
    %v338 = vsel %vm336, %v331, 0
    %340 = vmatprep.subr.mxu0 0.0
    %341 = vmatpush1.msra.mxu0 0.0
    %342 = vmatprep.subr.mxu0 0.0
    %343 = vmatpush1.msra.mxu0 0.0
    %344 = vmatprep.subr.mxu0 0.0
    %345 = vmatpush1.msra.mxu0 0.0
    %346 = vmatprep.subr.mxu0 0.0
    %347 = vmatpush1.msra.mxu0 0.0
    %348 = vmatprep.subr.mxu0 0.0
    %349 = vmatpush1.msra.mxu0 0.0
    %350 = vmatprep.subr.mxu0 0.0
    %351 = vmatpush1.msra.mxu0 0.0
    %352 = vmatprep.subr.mxu0 0.0
    %353 = vmatpush1.msra.mxu0 0.0
    %354 = vmatprep.subr.mxu0 0.0
    %355 = vmatpush1.msra.mxu0 0.0
    %356 = vmatprep.subr.mxu0 0.0
    %357 = vmatpush1.msra.mxu0 0.0
    %358 = vmatprep.subr.mxu0 0.0
    %359 = vmatpush1.msra.mxu0 0.0
    %360 = vmatprep.subr.mxu0 0.0
    %361 = vmatpush1.msra.mxu0 0.0
    %362 = vmatprep.subr.mxu0 0.0
    %363 = vmatpush1.msra.mxu0 0.0
    %364 = vmatprep.subr.mxu0 0.0
    %365 = vmatpush1.msra.mxu0 0.0
    %366 = vmatprep.subr.mxu0 0.0
    %367 = vmatpush1.msra.mxu0 0.0
    %368 = vmatprep.subr.mxu0 0.0
    %369 = vmatpush1.msra.mxu0 0.0
    %370 = vmatprep.subr.mxu0 0.0
    %371 = vmatpush1.msra.mxu0 %v338
    %372 = vmatprep.subr.mxu0 0.0
    %373 = vmatpush2.msra.mxu0 0.0
    %374 = vmatprep.subr.mxu0 0.0
    %375 = vmatpush2.msra.mxu0 0.0
    %376 = vmatprep.subr.mxu0 0.0
    %377 = vmatpush2.msra.mxu0 0.0
    %378 = vmatprep.subr.mxu0 0.0
    %379 = vmatpush2.msra.mxu0 0.0
    %380 = vmatprep.subr.mxu0 0.0
    %381 = vmatpush2.msra.mxu0 0.0
    %382 = vmatprep.subr.mxu0 0.0
    %383 = vmatpush2.msra.mxu0 0.0
    %384 = vmatprep.subr.mxu0 0.0
    %385 = vmatpush2.msra.mxu0 0.0
    %386 = vmatprep.subr.mxu0 0.0
    %387 = vmatpush2.msra.mxu0 0.0
    %388 = vmatprep.subr.mxu0 0.0
    %389 = vmatpush2.msra.mxu0 0.0
    %390 = vmatprep.subr.mxu0 0.0
    %391 = vmatpush2.msra.mxu0 0.0
    %392 = vmatprep.subr.mxu0 0.0
    %393 = vmatpush2.msra.mxu0 0.0
    %394 = vmatprep.subr.mxu0 0.0
    %395 = vmatpush2.msra.mxu0 0.0
    %396 = vmatprep.subr.mxu0 0.0
    %397 = vmatpush2.msra.mxu0 0.0
    %398 = vmatprep.subr.mxu0 0.0
    %399 = vmatpush2.msra.mxu0 0.0
    %400 = vmatprep.subr.mxu0 0.0
    %401 = vmatpush2.msra.mxu0 0.0
    %402 = vmatprep.subr.mxu0 0.0
    %403 = vmatpush2.msra.mxu0 0.0
    %404 = vmatprep.mubr.f32.mxu0 0.0
    %405 = vmatmul.mubr.f32.gmra.mxu0 %v334
    %v406 = vpop.f32.mrf.mxu0
    %v407 = vadd.f32 0.0, %v406
    %v408 = vpop.f32.mrf.mxu0
    %409 = vdwg.mxu0
    %vm410 = vcmask 80896
    %v412 = vsel %vm410, %v328, 0
    %vm414 = vcmask 1041408
    %v416 = vsel %vm414, %v330, 0
    %418 = vmatprep.subr.mxu0 0.0
    %419 = vmatpush1.msra.mxu0 0.0
    %420 = vmatprep.subr.mxu0 0.0
    %421 = vmatpush1.msra.mxu0 0.0
    %422 = vmatprep.subr.mxu0 0.0
    %423 = vmatpush1.msra.mxu0 0.0
    %424 = vmatprep.subr.mxu0 0.0
    %425 = vmatpush1.msra.mxu0 0.0
    %426 = vmatprep.subr.mxu0 0.0
    %427 = vmatpush1.msra.mxu0 0.0
    %428 = vmatprep.subr.mxu0 0.0
    %429 = vmatpush1.msra.mxu0 0.0
    %430 = vmatprep.subr.mxu0 0.0
    %431 = vmatpush1.msra.mxu0 0.0
    %432 = vmatprep.subr.mxu0 0.0
    %433 = vmatpush1.msra.mxu0 0.0
    %434 = vmatprep.subr.mxu0 0.0
    %435 = vmatpush1.msra.mxu0 0.0
    %436 = vmatprep.subr.mxu0 0.0
    %437 = vmatpush1.msra.mxu0 0.0
    %438 = vmatprep.subr.mxu0 0.0
    %439 = vmatpush1.msra.mxu0 0.0
    %440 = vmatprep.subr.mxu0 0.0
    %441 = vmatpush1.msra.mxu0 0.0
    %442 = vmatprep.subr.mxu0 0.0
    %443 = vmatpush1.msra.mxu0 0.0
    %444 = vmatprep.subr.mxu0 0.0
    %445 = vmatpush1.msra.mxu0 0.0
    %446 = vmatprep.subr.mxu0 0.0
    %447 = vmatpush1.msra.mxu0 %v416
    %448 = vmatprep.subr.mxu0 0.0
    %449 = vmatpush1.msra.mxu0 %v329
    %450 = vmatprep.subr.mxu0 0.0
    %451 = vmatpush2.msra.mxu0 0.0
    %452 = vmatprep.subr.mxu0 0.0
    %453 = vmatpush2.msra.mxu0 0.0
    %454 = vmatprep.subr.mxu0 0.0
    %455 = vmatpush2.msra.mxu0 0.0
    %456 = vmatprep.subr.mxu0 0.0
    %457 = vmatpush2.msra.mxu0 0.0
    %458 = vmatprep.subr.mxu0 0.0
    %459 = vmatpush2.msra.mxu0 0.0
    %460 = vmatprep.subr.mxu0 0.0
    %461 = vmatpush2.msra.mxu0 0.0
    %462 = vmatprep.subr.mxu0 0.0
    %463 = vmatpush2.msra.mxu0 0.0
    %464 = vmatprep.subr.mxu0 0.0
    %465 = vmatpush2.msra.mxu0 0.0
    %466 = vmatprep.subr.mxu0 0.0
    %467 = vmatpush2.msra.mxu0 0.0
    %468 = vmatprep.subr.mxu0 0.0
    %469 = vmatpush2.msra.mxu0 0.0
    %470 = vmatprep.subr.mxu0 0.0
    %471 = vmatpush2.msra.mxu0 0.0
    %472 = vmatprep.subr.mxu0 0.0
    %473 = vmatpush2.msra.mxu0 0.0
    %474 = vmatprep.subr.mxu0 0.0
    %475 = vmatpush2.msra.mxu0 0.0
    %476 = vmatprep.subr.mxu0 0.0
    %477 = vmatpush2.msra.mxu0 0.0
    %478 = vmatprep.subr.mxu0 0.0
    %479 = vmatpush2.msra.mxu0 0.0
    %480 = vmatprep.subr.mxu0 0.0
    %481 = vmatpush2.msra.mxu0 0.0
    %482 = vmatprep.mubr.f32.mxu0 0.0
    %483 = vmatmul.mubr.f32.gmra.mxu0 %v412
    %v484 = vpop.f32.mrf.mxu0
    %v485 = vadd.f32 %v407, %v484
    %v486 = vpop.f32.mrf.mxu0
    %487 = vdwg.mxu0
    %v488 = vld [vmem:[%s11] sm:$0x1]
    %v490 = vlaneseq
    %v491 = vshrl.u32 %v490, 7
    %v492 = vsub.s32 0, %v491
    %v493 = vrot.slane %v488, %v492
    %v495 = vadd.f32 %v485, %v493
    %v496 = vmax.f32 %v495, 0.0
    %v497 = vld [vmem:[%s12] sm:$0xff]
    %v498 = vld [vmem:[%s12 + $0x8] sm:$0xff]
    %v499 = vld [vmem:[%s12 + $0x10] sm:$0xf]
    %v500 = vld [vmem:[%s13] sm:$0x1]
    %v502 = vlaneseq
    %v503 = vshrl.u32 %v502, 7
    %v504 = vsub.s32 0, %v503
    %v505 = vrot.slane %v500, %v504
    %v508 = vsel %vm162, %v496, 0
    %v511 = vsel %vm166, %v499, 0
    %513 = vmatprep.subr.mxu0 0.0
    %514 = vmatpush1.msra.mxu0 0.0
    %515 = vmatprep.subr.mxu0 0.0
    %516 = vmatpush1.msra.mxu0 0.0
    %517 = vmatprep.subr.mxu0 0.0
    %518 = vmatpush1.msra.mxu0 0.0
    %519 = vmatprep.subr.mxu0 0.0
    %520 = vmatpush1.msra.mxu0 0.0
    %521 = vmatprep.subr.mxu0 0.0
    %522 = vmatpush1.msra.mxu0 0.0
    %523 = vmatprep.subr.mxu0 0.0
    %524 = vmatpush1.msra.mxu0 0.0
    %525 = vmatprep.subr.mxu0 0.0
    %526 = vmatpush1.msra.mxu0 0.0
    %527 = vmatprep.subr.mxu0 0.0
    %528 = vmatpush1.msra.mxu0 0.0
    %529 = vmatprep.subr.mxu0 0.0
    %530 = vmatpush1.msra.mxu0 0.0
    %531 = vmatprep.subr.mxu0 0.0
    %532 = vmatpush1.msra.mxu0 0.0
    %533 = vmatprep.subr.mxu0 0.0
    %534 = vmatpush1.msra.mxu0 0.0
    %535 = vmatprep.subr.mxu0 0.0
    %536 = vmatpush1.msra.mxu0 0.0
    %537 = vmatprep.subr.mxu0 0.0
    %538 = vmatpush1.msra.mxu0 0.0
    %539 = vmatprep.subr.mxu0 0.0
    %540 = vmatpush1.msra.mxu0 %v511
    %541 = vmatprep.subr.mxu0 0.0
    %542 = vmatpush1.msra.mxu0 %v498
    %543 = vmatprep.subr.mxu0 0.0
    %544 = vmatpush1.msra.mxu0 %v497
    %545 = vmatprep.subr.mxu0 0.0
    %546 = vmatpush2.msra.mxu0 0.0
    %547 = vmatprep.subr.mxu0 0.0
    %548 = vmatpush2.msra.mxu0 0.0
    %549 = vmatprep.subr.mxu0 0.0
    %550 = vmatpush2.msra.mxu0 0.0
    %551 = vmatprep.subr.mxu0 0.0
    %552 = vmatpush2.msra.mxu0 0.0
    %553 = vmatprep.subr.mxu0 0.0
    %554 = vmatpush2.msra.mxu0 0.0
    %555 = vmatprep.subr.mxu0 0.0
    %556 = vmatpush2.msra.mxu0 0.0
    %557 = vmatprep.subr.mxu0 0.0
    %558 = vmatpush2.msra.mxu0 0.0
    %559 = vmatprep.subr.mxu0 0.0
    %560 = vmatpush2.msra.mxu0 0.0
    %561 = vmatprep.subr.mxu0 0.0
    %562 = vmatpush2.msra.mxu0 0.0
    %563 = vmatprep.subr.mxu0 0.0
    %564 = vmatpush2.msra.mxu0 0.0
    %565 = vmatprep.subr.mxu0 0.0
    %566 = vmatpush2.msra.mxu0 0.0
    %567 = vmatprep.subr.mxu0 0.0
    %568 = vmatpush2.msra.mxu0 0.0
    %569 = vmatprep.subr.mxu0 0.0
    %570 = vmatpush2.msra.mxu0 0.0
    %571 = vmatprep.subr.mxu0 0.0
    %572 = vmatpush2.msra.mxu0 0.0
    %573 = vmatprep.subr.mxu0 0.0
    %574 = vmatpush2.msra.mxu0 0.0
    %575 = vmatprep.subr.mxu0 0.0
    %576 = vmatpush2.msra.mxu0 0.0
    %577 = vmatprep.mubr.f32.mxu0 0.0
    %578 = vmatmul.mubr.f32.gmra.mxu0 %v508
    %v579 = vpop.f32.mrf.mxu0
    %v580 = vadd.f32 %v505, %v579
    %v581 = vpop.f32.mrf.mxu0
    %582 = vdwg.mxu0
    %v583 = vxor.u32 %v580, 2147483648
    %v584 = vmul.f32 %v583, 1.442695
    %v585 = vpow.pop %v584
    %v586 = vadd.f32 %v585, 1.0
    %v587 = vrcp.pop %v586
    %v588 = vmul.f32 1.0, %v587
    %589 = vst [vmem:[#allocation2] sm:$0xff] %v588
    %590 = vst.msk [vmem:[%s15] sm:$0xff] %vm410, %v237
    %592 = vrot.lane.b32.xlu0 %v320, 10
    %v593 = vpop.permute.xlu0 %592
    %vm595 = vcmask 162896
    %596 = vst.msk [vmem:[%s15] sm:$0xff] %vm595, %v593
    // Predicated region
    $region58: #{cvae_forward.1} parent=1 // pred_check
      _
    $region59: #{cvae_forward.1} parent=1 // pred_check_branch
      %598 = sbr.rel (0) target = $region61
    $region60: #{cvae_forward.1} parent=1 // pred_region
      %s600 = ssub.s32 128, 128
      %601 = vsyncadd [#allocation3], %s600
      %s603 = sshll.u32 [#allocation2], 4
      %s604 = int_to_ptr.vmem [resolvable:$true] %s603
      %606 = dma.vmem_to_hbm [thread:$0]  %s604, 128, %s14, [#allocation3]
    $region61: #{cvae_forward.1} parent=1 // pred_fallthru
      _
    // Predicated region
    $region62: #{cvae_forward.1} parent=1 // pred_check
      _
    $region63: #{cvae_forward.1} parent=1 // pred_check_branch
      %608 = sbr.rel (0) target = $region65
    $region64: #{cvae_forward.1} parent=1 // pred_region
      _
    $region65: #{cvae_forward.1} parent=1 // pred_fallthru
      _
    // Predicated region
    $region66: #{cvae_forward.1} parent=1 // pred_check
      _
    $region67: #{cvae_forward.1} parent=1 // pred_check_branch
      %610 = sbr.rel (0) target = $region69
    $region68: #{cvae_forward.1} parent=1 // pred_region
      %611 = dma.done [#allocation3], 128
    $region69: #{cvae_forward.1} parent=1 // pred_fallthru
      _
    // Predicated region
    $region70: #{cvae_forward.1} parent=1 // pred_check
      _
    $region71: #{cvae_forward.1} parent=1 // pred_check_branch
      %613 = sbr.rel (0) target = $region73
    $region72: #{cvae_forward.1} parent=1 // pred_region
      _
    $region73: #{cvae_forward.1} parent=1 // pred_fallthru
      _
    %614 = vsyncpa [#allocation3], 1

</llo_original>
